<compile_context>
chip_gen: v6e
topology: v6e:2x2x1
jax: 0.10.0
libtpu: 0.0.40
codegen_flags: <defaults>
</compile_context>

<pallas_src>
import functools

import jax
import jax.numpy as jnp
from jax.experimental import pallas as pl
from jax.experimental.pallas import tpu as pltpu


def _round_up(x, m):
    return (x + m - 1) // m * m


def _lanes(n):       # last-dim footprint in VMEM (128-lane vregs)
    return _round_up(max(n, 1), 128)


def _sublanes(n):    # second-to-last-dim footprint in VMEM (8 sublanes)
    return _round_up(max(n, 1), 8)


def _attention_fusion_kernel(q_ref, kv_ref, wq_ref, bq_ref, wkt_ref, bk_ref,
                             wv_ref, bv_ref, out_ref,
                             qk_sc, qbk_sc, m_sc, l_sc, acc_sc,
                             *, inv_scale, seq_len, block_s):
    # q_ref   : (TB, Dq)       f32   query tile (constant across the S axis)
    # kv_ref  : (TB, TS, Dkv)  f32   streamed key/value tile
    # wq_ref  : (Dq, Hp)  bf16,  bq_ref : (1, Hp) f32
    # wkt_ref : (Hp, Dkv) bf16,  bk_ref : (1, Hp) f32
    # wv_ref  : (Dkv, Hp) bf16,  bv_ref : (1, Hp) f32     (all VMEM-resident)
    # out_ref : (TB, Hp)  f32   (resident across the S axis, written at the end)
    s_idx = pl.program_id(1)

    @pl.when(s_idx == 0)
    def _init():
        # Project the query tile once per batch block (MXU, bf16 operands,
        # f32 accumulate), then fold Wk into the query:
        #   q . (kv @ Wk + bk) == kv . (Wk^T q) + q . bk
        q = (jnp.dot(q_ref[...].astype(jnp.bfloat16), wq_ref[...],
                     preferred_element_type=jnp.float32) + bq_ref[...])      # (TB, Hp)
        qk_sc[...] = jnp.dot(q.astype(jnp.bfloat16), wkt_ref[...],
                             preferred_element_type=jnp.float32)             # (TB, Dkv)
        qbk_sc[...] = jnp.sum(q * bk_ref[...], axis=-1, keepdims=True)       # (TB, 1)
        m_sc[...] = jnp.full_like(m_sc, -jnp.inf)
        l_sc[...] = jnp.zeros_like(l_sc)
        acc_sc[...] = jnp.zeros_like(acc_sc)

    kv = kv_ref[...]                                                          # (TB, TS, Dkv) f32
    # Scores for this sequence tile: VPU broadcast-multiply + lane reduce over
    # Dkv (contraction width is Dkv, not Hp, thanks to the refactor).
    scores = (jnp.sum(kv * qk_sc[...][:, None, :], axis=-1)
              + qbk_sc[...]) * inv_scale                                      # (TB, TS)
    # Mask host-padded sequence positions (zero kv rows would otherwise
    # contribute exp(q.bk) to the softmax denominator).
    pos = s_idx * block_s + jax.lax.broadcasted_iota(jnp.int32, scores.shape, 1)
    scores = jnp.where(pos < seq_len, scores, -jnp.inf)

    # Flash-style online softmax over the sequence axis; the context
    # accumulator lives in the *unprojected* kv space (width Dkv).
    m_prev = m_sc[...]
    m_new = jnp.maximum(m_prev, jnp.max(scores, axis=-1, keepdims=True))      # (TB, 1)
    alpha = jnp.exp(m_prev - m_new)                                           # (TB, 1)
    p = jnp.exp(scores - m_new)                                               # (TB, TS)
    l_sc[...] = alpha * l_sc[...] + jnp.sum(p, axis=-1, keepdims=True)
    acc_sc[...] = alpha * acc_sc[...] + jnp.sum(p[:, :, None] * kv, axis=1)   # (TB, Dkv)
    m_sc[...] = m_new

    @pl.when(s_idx == pl.num_programs(1) - 1)
    def _finalize():
        # attn @ v == ((attn @ kv) @ Wv) + bv   because softmax rows sum to 1.
        u = acc_sc[...] * pl.reciprocal(l_sc[...], approx=True)               # (TB, Dkv)
        ctx = jnp.dot(u.astype(jnp.bfloat16), wv_ref[...],
                      preferred_element_type=jnp.float32) + bv_ref[...]       # (TB, Hp)
        out_ref[...] = ctx.astype(out_ref.dtype)


# ---------------------------------------------------------------------------
# Host-side tiling: derive (TB, TS) from an explicit VMEM budget.
# ---------------------------------------------------------------------------
_VMEM_BUDGET = 32 * 1024 * 1024   # target for accounted usage (fits v7x 64 MiB)
_VMEM_LIMIT = 48 * 1024 * 1024    # scoped limit handed to Mosaic (> defaults, < v7x physical)


def _vmem_bytes(tb, ts, dq, dkv, hp, kv_buffers=2):
    f32, bf16 = 4, 2
    kv_blk = kv_buffers * tb * ts * _lanes(dkv) * f32          # pipelined kv tiles
    q_blk = 2 * tb * _lanes(dq) * f32                          # pipelined query tile
    out_blk = 2 * tb * hp * f32                                # pipelined output tile
    weights = (_sublanes(dq) * hp + _sublanes(hp) * _lanes(dkv)
               + _sublanes(dkv) * hp) * bf16                   # Wq, Wk^T, Wv (single copy)
    biases = 3 * 8 * hp * f32
    scratch = tb * (2 * _lanes(dkv) + 3 * 128) * f32           # qk, acc, qbk, m, l
    temps = 4 * tb * ts * _lanes(dkv) * f32 + 4 * tb * _lanes(ts) * f32
    return kv_blk + q_blk + out_blk + weights + biases + scratch + temps


def _choose_tiles(b, s, dq, dkv, hp):
    ts = min(_round_up(s, 8), 512)
    tb = min(_round_up(b, 8), 512)
    if b >= 16:
        # Keep at least two batch blocks so both v7x TensorCores get work on
        # the "parallel" grid axis.
        tb = min(tb, _round_up((b + 1) // 2, 8))
    while tb > 8 and _vmem_bytes(tb, ts, dq, dkv, hp) > _VMEM_BUDGET:
        tb -= 8
    while ts > 8 and _vmem_bytes(tb, ts, dq, dkv, hp) > _VMEM_BUDGET:
        ts = _round_up(ts // 2, 8)
    return tb, ts


def attention_fusion(query, key_value, wq, bq, wk, bk, wv, bv):
    """query: (B, Dq), key_value: (B, S, Dkv) -> (B, H).  Weights are (in, out)."""
    B, Dq = query.shape
    _, S, Dkv = key_value.shape
    H = wq.shape[1]
    inv_scale = 1.0 / (float(H) ** 0.5)          # scale uses the *unpadded* H

    # Pad the hidden (lane) dim once so every tile / the output store is
    # lane-dense; the zero columns are mathematically inert.
    Hp = _round_up(H, 128)
    if Hp != H:
        pad = ((0, 0), (0, Hp - H))
        wq, wk, wv = (jnp.pad(w, pad) for w in (wq, wk, wv))
        bq, bk, bv = (jnp.pad(b, pad) for b in (bq, bk, bv))
    # Wk is consumed transposed: scores fold Wk into the query (kv . Wk^T q).
    wkt = wk.T                                                   # (Hp, Dkv)
    # bf16 MXU operands; accumulation stays f32 (preferred_element_type).
    wq_b, wkt_b, wv_b = (w.astype(jnp.bfloat16) for w in (wq, wkt, wv))

    TB, TS = _choose_tiles(B, S, Dq, Dkv, Hp)
    # Pad batch / sequence to tile multiples so no block ever reads OOB.
    # Padded sequence rows are masked to -inf in-kernel; padded batch rows are
    # computed on zeros (finite) and sliced off below.
    Bp, Sp = _round_up(B, TB), _round_up(S, TS)
    if Bp != B:
        query = jnp.pad(query, ((0, Bp - B), (0, 0)))
        key_value = jnp.pad(key_value, ((0, Bp - B), (0, 0), (0, 0)))
    if Sp != S:
        key_value = jnp.pad(key_value, ((0, 0), (0, Sp - S), (0, 0)))

    grid = (Bp // TB, Sp // TS)
    kernel = functools.partial(_attention_fusion_kernel,
                               inv_scale=inv_scale, seq_len=S, block_s=TS)
    # Whole-array VMEM-resident refs: single copy, no double-buffering of the
    # constant weights/biases.
    resident = pl.BlockSpec(memory_space=pltpu.MemorySpace.VMEM)

    out = pl.pallas_call(
        kernel,
        out_shape=jax.ShapeDtypeStruct((Bp, Hp), jnp.float32),
        grid_spec=pltpu.PrefetchScalarGridSpec(
            num_scalar_prefetch=0,
            grid=grid,
            in_specs=[
                pl.BlockSpec((TB, Dq), lambda b, s: (b, 0)),          # query tile
                # kv tile streamed over S.  On v5e, if the profile shows
                # exposed kv DMA, add pipeline_mode=pl.Buffered(3) here.
                pl.BlockSpec((TB, TS, Dkv), lambda b, s: (b, s, 0)),
                resident,   # Wq   (Dq, Hp)  bf16
                resident,   # bq   (1, Hp)   f32
                resident,   # Wk^T (Hp, Dkv) bf16
                resident,   # bk   (1, Hp)   f32
                resident,   # Wv   (Dkv, Hp) bf16
                resident,   # bv   (1, Hp)   f32
            ],
            out_specs=pl.BlockSpec((TB, Hp), lambda b, s: (b, 0)),
            scratch_shapes=[
                pltpu.VMEM((TB, Dkv), jnp.float32),   # qk  = Wk^T q
                pltpu.VMEM((TB, 1), jnp.float32),     # qbk = q . bk
                pltpu.VMEM((TB, 1), jnp.float32),     # running max
                pltpu.VMEM((TB, 1), jnp.float32),     # running denominator
                pltpu.VMEM((TB, Dkv), jnp.float32),   # running sum_s attn*kv
            ],
        ),
        compiler_params=pltpu.CompilerParams(
            dimension_semantics=("parallel", "arbitrary"),
            vmem_limit_bytes=_VMEM_LIMIT),
    )(query, key_value, wq_b, bq, wkt_b, bk, wv_b, bv)

    # Drop padded batch rows and padded hidden columns.
    return out[:B, :H]


def _reference(query, key_value, wq, bq, wk, bk, wv, bv):
    H = wq.shape[1]
    q = (query @ wq + bq)[:, None, :]                 # (B, 1, H)
    k = key_value @ wk + bk                           # (B, S, H)
    v = key_value @ wv + bv                           # (B, S, H)
    scores = jnp.einsum("bqh,bsh->bqs", q, k) / (H ** 0.5)
    w = jax.nn.softmax(scores, axis=-1)
    ctx = jnp.einsum("bqs,bsh->bqh", w, v)[:, 0, :]
    return ctx


if __name__ == "__main__":
    # Small, deterministic problem sizes.
    B, S = 2, 8
    query_dim, key_value_dim, hidden_dim = 32, 24, 32

    key = jax.random.PRNGKey(0)
    k_q, k_kv, k_wq, k_bq, k_wk, k_bk, k_wv, k_bv = jax.random.split(key, 8)

    query = jax.random.normal(k_q, (B, query_dim), dtype=jnp.float32)
    key_value = jax.random.normal(k_kv, (B, S, key_value_dim), dtype=jnp.float32)

    # nn.Linear-style init: U(-1/sqrt(fan_in), 1/sqrt(fan_in)); stored as (in, out).
    def linear_params(kw, kb, fan_in, fan_out):
        bound = 1.0 / (fan_in ** 0.5)
        w = jax.random.uniform(kw, (fan_in, fan_out), jnp.float32, -bound, bound)
        b = jax.random.uniform(kb, (1, fan_out), jnp.float32, -bound, bound)
        return w, b

    wq, bq = linear_params(k_wq, k_bq, query_dim, hidden_dim)
    wk, bk = linear_params(k_wk, k_bk, key_value_dim, hidden_dim)
    wv, bv = linear_params(k_wv, k_bv, key_value_dim, hidden_dim)

    out = attention_fusion(query, key_value, wq, bq, wk, bk, wv, bv)
    out = jax.block_until_ready(out)

    ref = _reference(query, key_value, wq, bq, wk, bk, wv, bv)
    assert out.shape == (B, hidden_dim)
    # Tolerance accounts for bf16 MXU operands (f32 accumulate) and the EUP
    # approximate reciprocal in the softmax normalization.
    assert jnp.allclose(out, ref, atol=2e-2, rtol=2e-2), "mismatch vs reference"

    print("KERNEL_OK")
</pallas_src>

<mosaic_0001>
module attributes {stable_mosaic.version = 11 : i64} {
  func.func @_attention_fusion_kernel(%arg0: i32, %arg1: i32, %arg2: memref<8x32xf32, #tpu.memory_space<vmem>>, %arg3: memref<8x8x24xf32, #tpu.memory_space<vmem>>, %arg4: memref<32x128xbf16, #tpu.memory_space<vmem>>, %arg5: memref<1x128xf32, #tpu.memory_space<vmem>>, %arg6: memref<128x24xbf16, #tpu.memory_space<vmem>>, %arg7: memref<1x128xf32, #tpu.memory_space<vmem>>, %arg8: memref<24x128xbf16, #tpu.memory_space<vmem>>, %arg9: memref<1x128xf32, #tpu.memory_space<vmem>>, %arg10: memref<8x128xf32, #tpu.memory_space<vmem>>, %arg11: memref<8x24xf32, #tpu.memory_space<vmem>>, %arg12: memref<8x1xf32, #tpu.memory_space<vmem>>, %arg13: memref<8x1xf32, #tpu.memory_space<vmem>>, %arg14: memref<8x1xf32, #tpu.memory_space<vmem>>, %arg15: memref<8x24xf32, #tpu.memory_space<vmem>>) attributes {dimension_semantics = [#tpu.dimension_semantics<parallel>, #tpu.dimension_semantics<arbitrary>], iteration_bounds = array<i64: 1, 1>, scalar_prefetch = 0 : i64, scratch_operands = 5 : i64, tpu.core_type = #tpu.core_type<tc>, window_params = [{transform_indices = @transform_0, window_bounds = array<i64: 8, 32>}, {transform_indices = @transform_1, window_bounds = array<i64: 8, 8, 24>}, {pipeline_mode = #tpu.pipeline_mode<synchronous>, transform_indices = @transform_2, window_bounds = array<i64: 32, 128>}, {pipeline_mode = #tpu.pipeline_mode<synchronous>, transform_indices = @transform_3, window_bounds = array<i64: 1, 128>}, {pipeline_mode = #tpu.pipeline_mode<synchronous>, transform_indices = @transform_4, window_bounds = array<i64: 128, 24>}, {pipeline_mode = #tpu.pipeline_mode<synchronous>, transform_indices = @transform_5, window_bounds = array<i64: 1, 128>}, {pipeline_mode = #tpu.pipeline_mode<synchronous>, transform_indices = @transform_6, window_bounds = array<i64: 24, 128>}, {pipeline_mode = #tpu.pipeline_mode<synchronous>, transform_indices = @transform_7, window_bounds = array<i64: 1, 128>}, {transform_indices = @transform_8, window_bounds = array<i64: 8, 128>}]} {
    %c0_i32 = arith.constant 0 : i32
    %0 = arith.cmpi eq, %arg1, %c0_i32 : i32
    %1 = arith.extui %0 : i1 to i32
    %c0_i32_0 = arith.constant 0 : i32
    %2 = arith.cmpi ne, %1, %c0_i32_0 : i32
    scf.if %2 {
      %c0_27 = arith.constant 0 : index
      %c0_28 = arith.constant 0 : index
      %50 = vector.load %arg2[%c0_27, %c0_28] : memref<8x32xf32, #tpu.memory_space<vmem>>, vector<8x32xf32>
      %51 = arith.truncf %50 : vector<8x32xf32> to vector<8x32xbf16>
      %c0_29 = arith.constant 0 : index
      %c0_30 = arith.constant 0 : index
      %52 = vector.load %arg4[%c0_29, %c0_30] : memref<32x128xbf16, #tpu.memory_space<vmem>>, vector<32x128xbf16>
      %cst_31 = arith.constant dense<0.000000e+00> : vector<8x128xf32>
      %53 = tpu.matmul %51, %52, %cst_31 {dimension_numbers = #tpu.dot_dimension_numbers<[1], [0], [0], [1], [0, 0, 1, 1], [], []>} : vector<8x32xbf16>, vector<32x128xbf16>, vector<8x128xf32> -> vector<8x128xf32>
      %c0_32 = arith.constant 0 : index
      %c0_33 = arith.constant 0 : index
      %54 = vector.load %arg5[%c0_32, %c0_33] : memref<1x128xf32, #tpu.memory_space<vmem>>, vector<1x128xf32>
      %55 = vector.broadcast %54 : vector<1x128xf32> to vector<8x128xf32>
      %56 = arith.addf %53, %55 : vector<8x128xf32>
      %57 = arith.truncf %56 : vector<8x128xf32> to vector<8x128xbf16>
      %c0_34 = arith.constant 0 : index
      %c0_35 = arith.constant 0 : index
      %58 = vector.load %arg6[%c0_34, %c0_35] : memref<128x24xbf16, #tpu.memory_space<vmem>>, vector<128x24xbf16>
      %cst_36 = arith.constant dense<0.000000e+00> : vector<8x24xf32>
      %59 = tpu.matmul %57, %58, %cst_36 {dimension_numbers = #tpu.dot_dimension_numbers<[1], [0], [0], [1], [0, 0, 1, 1], [], []>} : vector<8x128xbf16>, vector<128x24xbf16>, vector<8x24xf32> -> vector<8x24xf32>
      %c0_37 = arith.constant 0 : index
      %c0_38 = arith.constant 0 : index
      %60 = vector.load %arg11[%c0_37, %c0_38] : memref<8x24xf32, #tpu.memory_space<vmem>>, vector<8x24xf32>
      tpu.vector_store %arg11[%c0_37, %c0_38], %59 {strides = array<i32>} : memref<8x24xf32, #tpu.memory_space<vmem>>, vector<8x24xf32>,
      %c0_39 = arith.constant 0 : index
      %c0_40 = arith.constant 0 : index
      %61 = vector.load %arg7[%c0_39, %c0_40] : memref<1x128xf32, #tpu.memory_space<vmem>>, vector<1x128xf32>
      %62 = vector.broadcast %61 : vector<1x128xf32> to vector<8x128xf32>
      %63 = arith.mulf %56, %62 : vector<8x128xf32>
      %cst_41 = arith.constant dense<0.000000e+00> : vector<8xf32>
      %64 = vector.multi_reduction <add>, %63, %cst_41 [1] : vector<8x128xf32> to vector<8xf32>
      %65 = vector.shape_cast %64 : vector<8xf32> to vector<8x1xf32>
      %c0_42 = arith.constant 0 : index
      %c0_43 = arith.constant 0 : index
      %66 = vector.load %arg12[%c0_42, %c0_43] : memref<8x1xf32, #tpu.memory_space<vmem>>, vector<8x1xf32>
      tpu.vector_store %arg12[%c0_42, %c0_43], %65 {strides = array<i32>} : memref<8x1xf32, #tpu.memory_space<vmem>>, vector<8x1xf32>,
      %cst_44 = arith.constant 0xFF800000 : f32
      %67 = vector.broadcast %cst_44 : f32 to vector<8x1xf32>
      %c0_45 = arith.constant 0 : index
      %c0_46 = arith.constant 0 : index
      %68 = vector.load %arg13[%c0_45, %c0_46] : memref<8x1xf32, #tpu.memory_space<vmem>>, vector<8x1xf32>
      tpu.vector_store %arg13[%c0_45, %c0_46], %67 {strides = array<i32>} : memref<8x1xf32, #tpu.memory_space<vmem>>, vector<8x1xf32>,
      %cst_47 = arith.constant 0.000000e+00 : f32
      %69 = vector.broadcast %cst_47 : f32 to vector<8x1xf32>
      %c0_48 = arith.constant 0 : index
      %c0_49 = arith.constant 0 : index
      %70 = vector.load %arg14[%c0_48, %c0_49] : memref<8x1xf32, #tpu.memory_space<vmem>>, vector<8x1xf32>
      tpu.vector_store %arg14[%c0_48, %c0_49], %69 {strides = array<i32>} : memref<8x1xf32, #tpu.memory_space<vmem>>, vector<8x1xf32>,
      %cst_50 = arith.constant 0.000000e+00 : f32
      %71 = vector.broadcast %cst_50 : f32 to vector<8x24xf32>
      %c0_51 = arith.constant 0 : index
      %c0_52 = arith.constant 0 : index
      %72 = vector.load %arg15[%c0_51, %c0_52] : memref<8x24xf32, #tpu.memory_space<vmem>>, vector<8x24xf32>
      tpu.vector_store %arg15[%c0_51, %c0_52], %71 {strides = array<i32>} : memref<8x24xf32, #tpu.memory_space<vmem>>, vector<8x24xf32>,
    } else {
    }
    %c0 = arith.constant 0 : index
    %c0_1 = arith.constant 0 : index
    %c0_2 = arith.constant 0 : index
    %3 = vector.load %arg3[%c0, %c0_1, %c0_2] : memref<8x8x24xf32, #tpu.memory_space<vmem>>, vector<8x8x24xf32>
    %c0_3 = arith.constant 0 : index
    %c0_4 = arith.constant 0 : index
    %4 = vector.load %arg11[%c0_3, %c0_4] : memref<8x24xf32, #tpu.memory_space<vmem>>, vector<8x24xf32>
    %5 = vector.shape_cast %4 : vector<8x24xf32> to vector<8x1x24xf32>
    %6 = vector.broadcast %5 : vector<8x1x24xf32> to vector<8x8x24xf32>
    %7 = arith.mulf %3, %6 : vector<8x8x24xf32>
    %cst = arith.constant dense<0.000000e+00> : vector<8x8xf32>
    %8 = vector.multi_reduction <add>, %7, %cst [2] : vector<8x8x24xf32> to vector<8x8xf32>
    %c0_5 = arith.constant 0 : index
    %c0_6 = arith.constant 0 : index
    %9 = vector.load %arg12[%c0_5, %c0_6] : memref<8x1xf32, #tpu.memory_space<vmem>>, vector<8x1xf32>
    %10 = vector.broadcast %9 : vector<8x1xf32> to vector<8x8xf32>
    %11 = arith.addf %8, %10 : vector<8x8xf32>
    %cst_7 = arith.constant 0.176776692 : f32
    %12 = vector.broadcast %cst_7 : f32 to vector<8x8xf32>
    %13 = arith.mulf %11, %12 : vector<8x8xf32>
    %c8_i32 = arith.constant 8 : i32
    %14 = arith.muli %arg1, %c8_i32 : i32
    %15 = tpu.iota {dimensions = array<i32: 1>} : vector<8x8xi32>
    %16 = vector.broadcast %14 : i32 to vector<8x8xi32>
    %17 = arith.addi %16, %15 : vector<8x8xi32>
    %c8_i32_8 = arith.constant 8 : i32
    %18 = vector.broadcast %c8_i32_8 : i32 to vector<8x8xi32>
    %19 = arith.cmpi slt, %17, %18 : vector<8x8xi32>
    %cst_9 = arith.constant 0xFF800000 : f32
    %20 = vector.broadcast %cst_9 : f32 to vector<8x8xf32>
    %21 = arith.select %19, %13, %20 : vector<8x8xi1>, vector<8x8xf32>
    %c0_10 = arith.constant 0 : index
    %c0_11 = arith.constant 0 : index
    %22 = vector.load %arg13[%c0_10, %c0_11] : memref<8x1xf32, #tpu.memory_space<vmem>>, vector<8x1xf32>
    %cst_12 = arith.constant dense<0xFF800000> : vector<8xf32>
    %23 = vector.multi_reduction <maximumf>, %21, %cst_12 [1] : vector<8x8xf32> to vector<8xf32>
    %24 = vector.shape_cast %23 : vector<8xf32> to vector<8x1xf32>
    %25 = arith.maximumf %22, %24 : vector<8x1xf32>
    %26 = arith.subf %22, %25 : vector<8x1xf32>
    %27 = math.exp %26 : vector<8x1xf32>
    %28 = vector.broadcast %25 : vector<8x1xf32> to vector<8x8xf32>
    %29 = arith.subf %21, %28 : vector<8x8xf32>
    %30 = math.exp %29 : vector<8x8xf32>
    %c0_13 = arith.constant 0 : index
    %c0_14 = arith.constant 0 : index
    %31 = vector.load %arg14[%c0_13, %c0_14] : memref<8x1xf32, #tpu.memory_space<vmem>>, vector<8x1xf32>
    %32 = arith.mulf %27, %31 : vector<8x1xf32>
    %cst_15 = arith.constant dense<0.000000e+00> : vector<8xf32>
    %33 = vector.multi_reduction <add>, %30, %cst_15 [1] : vector<8x8xf32> to vector<8xf32>
    %34 = vector.shape_cast %33 : vector<8xf32> to vector<8x1xf32>
    %35 = arith.addf %32, %34 : vector<8x1xf32>
    %c0_16 = arith.constant 0 : index
    %c0_17 = arith.constant 0 : index
    %36 = vector.load %arg14[%c0_16, %c0_17] : memref<8x1xf32, #tpu.memory_space<vmem>>, vector<8x1xf32>
    tpu.vector_store %arg14[%c0_16, %c0_17], %35 {strides = array<i32>} : memref<8x1xf32, #tpu.memory_space<vmem>>, vector<8x1xf32>,
    %c0_18 = arith.constant 0 : index
    %c0_19 = arith.constant 0 : index
    %37 = vector.load %arg15[%c0_18, %c0_19] : memref<8x24xf32, #tpu.memory_space<vmem>>, vector<8x24xf32>
    %38 = vector.broadcast %27 : vector<8x1xf32> to vector<8x24xf32>
    %39 = arith.mulf %38, %37 : vector<8x24xf32>
    %40 = vector.shape_cast %30 : vector<8x8xf32> to vector<8x8x1xf32>
    %41 = vector.broadcast %40 : vector<8x8x1xf32> to vector<8x8x24xf32>
    %42 = arith.mulf %41, %3 : vector<8x8x24xf32>
    %cst_20 = arith.constant dense<0.000000e+00> : vector<8x24xf32>
    %43 = vector.multi_reduction <add>, %42, %cst_20 [1] : vector<8x8x24xf32> to vector<8x24xf32>
    %44 = arith.addf %39, %43 : vector<8x24xf32>
    %c0_21 = arith.constant 0 : index
    %c0_22 = arith.constant 0 : index
    %45 = vector.load %arg15[%c0_21, %c0_22] : memref<8x24xf32, #tpu.memory_space<vmem>>, vector<8x24xf32>
    tpu.vector_store %arg15[%c0_21, %c0_22], %44 {strides = array<i32>} : memref<8x24xf32, #tpu.memory_space<vmem>>, vector<8x24xf32>,
    %c0_23 = arith.constant 0 : index
    %c0_24 = arith.constant 0 : index
    %46 = vector.load %arg13[%c0_23, %c0_24] : memref<8x1xf32, #tpu.memory_space<vmem>>, vector<8x1xf32>
    tpu.vector_store %arg13[%c0_23, %c0_24], %25 {strides = array<i32>} : memref<8x1xf32, #tpu.memory_space<vmem>>, vector<8x1xf32>,
    %c0_i32_25 = arith.constant 0 : i32
    %47 = arith.cmpi eq, %arg1, %c0_i32_25 : i32
    %48 = arith.extui %47 : i1 to i32
    %c0_i32_26 = arith.constant 0 : i32
    %49 = arith.cmpi ne, %48, %c0_i32_26 : i32
    scf.if %49 {
      %c0_27 = arith.constant 0 : index
      %c0_28 = arith.constant 0 : index
      %50 = vector.load %arg15[%c0_27, %c0_28] : memref<8x24xf32, #tpu.memory_space<vmem>>, vector<8x24xf32>
      %c0_29 = arith.constant 0 : index
      %c0_30 = arith.constant 0 : index
      %51 = vector.load %arg14[%c0_29, %c0_30] : memref<8x1xf32, #tpu.memory_space<vmem>>, vector<8x1xf32>
      %52 = tpu.reciprocal %51 {approx = true} : vector<8x1xf32> -> vector<8x1xf32>
      %53 = vector.broadcast %52 : vector<8x1xf32> to vector<8x24xf32>
      %54 = arith.mulf %50, %53 : vector<8x24xf32>
      %55 = arith.truncf %54 : vector<8x24xf32> to vector<8x24xbf16>
      %c0_31 = arith.constant 0 : index
      %c0_32 = arith.constant 0 : index
      %56 = vector.load %arg8[%c0_31, %c0_32] : memref<24x128xbf16, #tpu.memory_space<vmem>>, vector<24x128xbf16>
      %cst_33 = arith.constant dense<0.000000e+00> : vector<8x128xf32>
      %57 = tpu.matmul %55, %56, %cst_33 {dimension_numbers = #tpu.dot_dimension_numbers<[1], [0], [0], [1], [0, 0, 1, 1], [], []>} : vector<8x24xbf16>, vector<24x128xbf16>, vector<8x128xf32> -> vector<8x128xf32>
      %c0_34 = arith.constant 0 : index
      %c0_35 = arith.constant 0 : index
      %58 = vector.load %arg9[%c0_34, %c0_35] : memref<1x128xf32, #tpu.memory_space<vmem>>, vector<1x128xf32>
      %59 = vector.broadcast %58 : vector<1x128xf32> to vector<8x128xf32>
      %60 = arith.addf %57, %59 : vector<8x128xf32>
      %c0_36 = arith.constant 0 : index
      %c0_37 = arith.constant 0 : index
      %61 = vector.load %arg10[%c0_36, %c0_37] : memref<8x128xf32, #tpu.memory_space<vmem>>, vector<8x128xf32>
      tpu.vector_store %arg10[%c0_36, %c0_37], %60 {strides = array<i32>} : memref<8x128xf32, #tpu.memory_space<vmem>>, vector<8x128xf32>,
    } else {
    }
    return
  }
  func.func @transform_0(%arg0: i32, %arg1: i32) -> (i32, i32) {
    %c0_i32 = arith.constant 0 : i32
    %c0_i32_0 = arith.constant 0 : i32
    return %arg0, %c0_i32 : i32, i32
  }
  func.func @transform_1(%arg0: i32, %arg1: i32) -> (i32, i32, i32) {
    %c0_i32 = arith.constant 0 : i32
    %c0_i32_0 = arith.constant 0 : i32
    return %arg0, %arg1, %c0_i32 : i32, i32, i32
  }
  func.func @transform_2(%arg0: i32, %arg1: i32) -> (i32, i32) {
    %c0_i32 = arith.constant 0 : i32
    %c0_i32_0 = arith.constant 0 : i32
    %c0_i32_1 = arith.constant 0 : i32
    return %c0_i32, %c0_i32_0 : i32, i32
  }
  func.func @transform_3(%arg0: i32, %arg1: i32) -> (i32, i32) {
    %c0_i32 = arith.constant 0 : i32
    %c0_i32_0 = arith.constant 0 : i32
    %c0_i32_1 = arith.constant 0 : i32
    return %c0_i32, %c0_i32_0 : i32, i32
  }
  func.func @transform_4(%arg0: i32, %arg1: i32) -> (i32, i32) {
    %c0_i32 = arith.constant 0 : i32
    %c0_i32_0 = arith.constant 0 : i32
    %c0_i32_1 = arith.constant 0 : i32
    return %c0_i32, %c0_i32_0 : i32, i32
  }
  func.func @transform_5(%arg0: i32, %arg1: i32) -> (i32, i32) {
    %c0_i32 = arith.constant 0 : i32
    %c0_i32_0 = arith.constant 0 : i32
    %c0_i32_1 = arith.constant 0 : i32
    return %c0_i32, %c0_i32_0 : i32, i32
  }
  func.func @transform_6(%arg0: i32, %arg1: i32) -> (i32, i32) {
    %c0_i32 = arith.constant 0 : i32
    %c0_i32_0 = arith.constant 0 : i32
    %c0_i32_1 = arith.constant 0 : i32
    return %c0_i32, %c0_i32_0 : i32, i32
  }
  func.func @transform_7(%arg0: i32, %arg1: i32) -> (i32, i32) {
    %c0_i32 = arith.constant 0 : i32
    %c0_i32_0 = arith.constant 0 : i32
    %c0_i32_1 = arith.constant 0 : i32
    return %c0_i32, %c0_i32_0 : i32, i32
  }
  func.func @transform_8(%arg0: i32, %arg1: i32) -> (i32, i32) {
    %c0_i32 = arith.constant 0 : i32
    %c0_i32_0 = arith.constant 0 : i32
    return %arg0, %c0_i32 : i32, i32
  }
}

</mosaic_0001>

<llo_original>
// kernel: tpu_custom_call.1
$region0: #{tpu_custom_call.1}
  #allocation0 [shape = 'u32[]', space=smem, size = 0x4, offset = 0x4, fixed_abs, tag = 'smem constant byte address 0x4 - core index']
  #allocation1 [shape = 'u32[144,128]{1,0:T(1,128)}', space=vmem, size = 0x12000, scoped, tag = 'internal scratch']
  #allocation2 [shape = 'f32[8,24]{1,0:T(8,128)}', space=vmem, size = 0x1000, scoped, tag = 'scratch operand']
  #allocation3 [shape = 'f32[8,1]{1,0:T(8,128)}', space=vmem, size = 0x1000, scoped, tag = 'scratch operand']
  #allocation4 [shape = 'f32[8,1]{1,0:T(8,128)}', space=vmem, size = 0x1000, scoped, tag = 'scratch operand']
  #allocation5 [shape = 'f32[8,1]{1,0:T(8,128)}', space=vmem, size = 0x1000, scoped, tag = 'scratch operand']
  #allocation6 [shape = 'f32[8,24]{1,0:T(8,128)}', space=vmem, size = 0x1000, scoped, tag = 'scratch operand']
  %s0 = inlined_call_operand.hbm [shape: f32[8,32], index: 0, kind: input, shape index: {}]
  %s1 = inlined_call_operand.vmem [shape: f32[8,8,24], index: 1, kind: input, shape index: {}]
  %s2 = inlined_call_operand.hbm [shape: bf16[32,128], index: 2, kind: input, shape index: {}]
  %s3 = inlined_call_operand.vmem [shape: f32[1,128], index: 3, kind: input, shape index: {}]
  %s4 = inlined_call_operand.vmem [shape: bf16[128,24], index: 4, kind: input, shape index: {}]
  %s5 = inlined_call_operand.vmem [shape: f32[1,128], index: 5, kind: input, shape index: {}]
  %s6 = inlined_call_operand.vmem [shape: bf16[24,128], index: 6, kind: input, shape index: {}]
  %s7 = inlined_call_operand.vmem [shape: f32[1,128], index: 7, kind: input, shape index: {}]
  %s8 = inlined_call_operand.hbm [shape: f32[8,128], index: 8, kind: output, shape index: {}]
  %s9 = sld [smem:[#allocation0]]
  $region58: #{tpu_custom_call.1} parent=0
    _
  %s11 = ssub.s32 1, %s9
  %s12 = scalar_select 0, %s11, %s9
  $region1: #{tpu_custom_call.1} parent=0
    #allocation7 [shape = 'u8[4096]{0}', space=vmem, size = 0x1000, scoped, tag = 'input window, operand 0, single buffered']
    #allocation8 [shape = 's32[1]{0}', space=sflag, size = 0x4, scoped, tag = 'scoped memory for tpu_custom_call.1']
    #allocation9 [shape = 's32[1]{0}', space=sflag, size = 0x4, scoped, tag = 'scoped memory for tpu_custom_call.1']
    #allocation10 [shape = 'u8[8192]{0}', space=vmem, size = 0x2000, scoped, tag = 'input window, operand 2, single buffered']
    #allocation11 [shape = 's32[1]{0}', space=sflag, size = 0x4, scoped, tag = 'scoped memory for tpu_custom_call.1']
    #allocation12 [shape = 'u8[4096]{0}', space=vmem, size = 0x1000, scoped, tag = 'output window, operand 0, single buffered']
    %13 = vsyncpa [#allocation8], 0
    %14 = vsyncpa [#allocation11], 0
    %15 = vsyncpa [#allocation9], 0
    // Predicated region
    $region2: #{tpu_custom_call.1} parent=1 // pred_check
      _
    $region3: #{tpu_custom_call.1} parent=1 // pred_check_branch
      %17 = sbr.rel (0) target = $region5
    $region4: #{tpu_custom_call.1} parent=1 // pred_region
      %s19 = ssub.s32 128, 128
      %20 = vsyncadd [#allocation8], %s19
      %s22 = sshll.u32 [#allocation7], 4
      %s23 = int_to_ptr.vmem [resolvable:$true] %s22
      %25 = dma.hbm_to_vmem [thread:$0]  %s0, 128, %s23, [#allocation8]
    $region5: #{tpu_custom_call.1} parent=1 // pred_fallthru
      _
    // Predicated region
    $region6: #{tpu_custom_call.1} parent=1 // pred_check
      _
    $region7: #{tpu_custom_call.1} parent=1 // pred_check_branch
      %27 = sbr.rel (0) target = $region9
    $region8: #{tpu_custom_call.1} parent=1 // pred_region
      _
    $region9: #{tpu_custom_call.1} parent=1 // pred_fallthru
      _
    // Predicated region
    $region10: #{tpu_custom_call.1} parent=1 // pred_check
      _
    $region11: #{tpu_custom_call.1} parent=1 // pred_check_branch
      %29 = sbr.rel (0) target = $region13
    $region12: #{tpu_custom_call.1} parent=1 // pred_region
      %s31 = ssub.s32 256, 256
      %32 = vsyncadd [#allocation11], %s31
      %s33 = sshll.u32 [#allocation10], 4
      %s34 = int_to_ptr.vmem [resolvable:$true] %s33
      %39 = dma.hbm_to_vmem [thread:$0]  %s2, 256, %s34, [#allocation11], 64, 64, 4
    $region13: #{tpu_custom_call.1} parent=1 // pred_fallthru
      _
    // Predicated region
    $region14: #{tpu_custom_call.1} parent=1 // pred_check
      _
    $region15: #{tpu_custom_call.1} parent=1 // pred_check_branch
      %41 = sbr.rel (0) target = $region17
    $region16: #{tpu_custom_call.1} parent=1 // pred_region
      _
    $region17: #{tpu_custom_call.1} parent=1 // pred_fallthru
      _
    // Predicated region
    $region18: #{tpu_custom_call.1} parent=1 // pred_check
      _
    $region19: #{tpu_custom_call.1} parent=1 // pred_check_branch
      %43 = sbr.rel (0) target = $region21
    $region20: #{tpu_custom_call.1} parent=1 // pred_region
      _
    $region21: #{tpu_custom_call.1} parent=1 // pred_fallthru
      _
    // Predicated region
    $region22: #{tpu_custom_call.1} parent=1 // pred_check
      _
    $region23: #{tpu_custom_call.1} parent=1 // pred_check_branch
      %45 = sbr.rel (0) target = $region25
    $region24: #{tpu_custom_call.1} parent=1 // pred_region
      _
    $region25: #{tpu_custom_call.1} parent=1 // pred_fallthru
      _
    // Predicated region
    $region26: #{tpu_custom_call.1} parent=1 // pred_check
      _
    $region27: #{tpu_custom_call.1} parent=1 // pred_check_branch
      %47 = sbr.rel (0) target = $region29
    $region28: #{tpu_custom_call.1} parent=1 // pred_region
      _
    $region29: #{tpu_custom_call.1} parent=1 // pred_fallthru
      _
    // Predicated region
    $region30: #{tpu_custom_call.1} parent=1 // pred_check
      _
    $region31: #{tpu_custom_call.1} parent=1 // pred_check_branch
      %49 = sbr.rel (0) target = $region33
    $region32: #{tpu_custom_call.1} parent=1 // pred_region
      _
    $region33: #{tpu_custom_call.1} parent=1 // pred_fallthru
      _
    // Predicated region
    $region34: #{tpu_custom_call.1} parent=1 // pred_check
      _
    $region35: #{tpu_custom_call.1} parent=1 // pred_check_branch
      %51 = sbr.rel (0) target = $region37
    $region36: #{tpu_custom_call.1} parent=1 // pred_region
      %52 = dma.done [#allocation8], 128
    $region37: #{tpu_custom_call.1} parent=1 // pred_fallthru
      _
    // Predicated region
    $region38: #{tpu_custom_call.1} parent=1 // pred_check
      _
    $region39: #{tpu_custom_call.1} parent=1 // pred_check_branch
      %54 = sbr.rel (0) target = $region41
    $region40: #{tpu_custom_call.1} parent=1 // pred_region
      %55 = dma.done [#allocation11], 256
    $region41: #{tpu_custom_call.1} parent=1 // pred_fallthru
      _
    %p57 = scmp.eq.s32.totalorder 0, 0
    // Predicated region
    $region42: #{tpu_custom_call.1} parent=1 // pred_check
      %p58 = pneg %p57
    $region43: #{tpu_custom_call.1} parent=1 // pred_check_branch
      %60 = sbr.rel (%p58) target = $region45
    $region44: #{tpu_custom_call.1} parent=1 // pred_region
      %v61 = vld [vmem:[#allocation7] sm:$0xff]
      %v62 = vpack.c.bf16 %v61, %v61
      %v63 = vld [vmem:[#allocation10] sm:$0xf]
      %v64 = vld [vmem:[#allocation10 + $0x4] sm:$0xf]
      %v65 = vld [vmem:[#allocation10 + $0x8] sm:$0xf]
      %v66 = vld [vmem:[#allocation10 + $0xc] sm:$0xf]
      %v67 = vld [vmem:[%s3] sm:$0x1]
      %v69 = vlaneseq
      %v70 = vshrl.u32 %v69, 7
      %v71 = vsub.s32 0, %v70
      %v72 = vrot.slane %v67, %v71
      %v78 = vunpack.c.l.b16 %v63
      %v79 = vunpack.c.l.b16 %v64
      %v80 = vunpack.c.l.b16 %v65
      %v81 = vunpack.c.l.b16 %v66
      %v82 = vpack.c.b16 %v79, %v78
      %v83 = vpack.c.b16 %v81, %v80
      %vm86 = vcmask 261120
      %v88 = vsel %vm86, %v62, 0
      %90 = vmatprep.subr.bf16.mxu0 0
      %91 = vmatpush1.bf16.msra.mxu0 0
      %92 = vmatprep.subr.bf16.mxu0 0
      %93 = vmatpush1.bf16.msra.mxu0 0
      %94 = vmatprep.subr.bf16.mxu0 0
      %95 = vmatpush1.bf16.msra.mxu0 0
      %96 = vmatprep.subr.bf16.mxu0 0
      %97 = vmatpush1.bf16.msra.mxu0 0
      %98 = vmatprep.subr.bf16.mxu0 0
      %99 = vmatpush1.bf16.msra.mxu0 0
      %100 = vmatprep.subr.bf16.mxu0 0
      %101 = vmatpush1.bf16.msra.mxu0 0
      %102 = vmatprep.subr.bf16.mxu0 0
      %103 = vmatpush1.bf16.msra.mxu0 %v83
      %104 = vmatprep.subr.bf16.mxu0 0
      %105 = vmatpush1.bf16.msra.mxu0 %v82
      %106 = vmatprep.subr.bf16.mxu0 0
      %107 = vmatpush2.bf16.msra.mxu0 0
      %108 = vmatprep.subr.bf16.mxu0 0
      %109 = vmatpush2.bf16.msra.mxu0 0
      %110 = vmatprep.subr.bf16.mxu0 0
      %111 = vmatpush2.bf16.msra.mxu0 0
      %112 = vmatprep.subr.bf16.mxu0 0
      %113 = vmatpush2.bf16.msra.mxu0 0
      %114 = vmatprep.subr.bf16.mxu0 0
      %115 = vmatpush2.bf16.msra.mxu0 0
      %116 = vmatprep.subr.bf16.mxu0 0
      %117 = vmatpush2.bf16.msra.mxu0 0
      %118 = vmatprep.subr.bf16.mxu0 0
      %119 = vmatpush2.bf16.msra.mxu0 0
      %120 = vmatprep.subr.bf16.mxu0 0
      %121 = vmatpush2.bf16.msra.mxu0 0
      %122 = vmatprep.mubr.bf16.mxu0 0
      %123 = vmatmul.mubr.bf16.gmra.mxu0 %v88
      %v124 = vpop.f32.mrf.mxu0
      %v125 = vadd.f32 %v72, %v124
      %v126 = vpop.f32.mrf.mxu0
      %v127 = vpop.f32.mrf.mxu0
      %v128 = vpop.f32.mrf.mxu0
      %129 = vdwg.mxu0
      %v130 = vpack.c.bf16 %v125, %v125
      %v131 = vld [vmem:[%s4] sm:$0xf]
      %v132 = vld [vmem:[%s4 + $0x4] sm:$0xf]
      %v133 = vld [vmem:[%s4 + $0x8] sm:$0xf]
      %v134 = vld [vmem:[%s4 + $0xc] sm:$0xf]
      %v135 = vld [vmem:[%s4 + $0x10] sm:$0xf]
      %v136 = vld [vmem:[%s4 + $0x14] sm:$0xf]
      %v137 = vld [vmem:[%s4 + $0x18] sm:$0xf]
      %v138 = vld [vmem:[%s4 + $0x1c] sm:$0xf]
      %v139 = vld [vmem:[%s4 + $0x20] sm:$0xf]
      %v140 = vld [vmem:[%s4 + $0x24] sm:$0xf]
      %v141 = vld [vmem:[%s4 + $0x28] sm:$0xf]
      %v142 = vld [vmem:[%s4 + $0x2c] sm:$0xf]
      %v143 = vld [vmem:[%s4 + $0x30] sm:$0xf]
      %v144 = vld [vmem:[%s4 + $0x34] sm:$0xf]
      %v145 = vld [vmem:[%s4 + $0x38] sm:$0xf]
      %v146 = vld [vmem:[%s4 + $0x3c] sm:$0xf]
      %v163 = vunpack.c.l.b16 %v131
      %v164 = vunpack.c.l.b16 %v132
      %v165 = vunpack.c.l.b16 %v133
      %v166 = vunpack.c.l.b16 %v134
      %v167 = vunpack.c.l.b16 %v135
      %v168 = vunpack.c.l.b16 %v136
      %v169 = vunpack.c.l.b16 %v137
      %v170 = vunpack.c.l.b16 %v138
      %v171 = vunpack.c.l.b16 %v139
      %v172 = vunpack.c.l.b16 %v140
      %v173 = vunpack.c.l.b16 %v141
      %v174 = vunpack.c.l.b16 %v142
      %v175 = vunpack.c.l.b16 %v143
      %v176 = vunpack.c.l.b16 %v144
      %v177 = vunpack.c.l.b16 %v145
      %v178 = vunpack.c.l.b16 %v146
      %v179 = vpack.c.b16 %v164, %v163
      %v180 = vpack.c.b16 %v166, %v165
      %v181 = vpack.c.b16 %v168, %v167
      %v182 = vpack.c.b16 %v170, %v169
      %v183 = vpack.c.b16 %v172, %v171
      %v184 = vpack.c.b16 %v174, %v173
      %v185 = vpack.c.b16 %v176, %v175
      %v186 = vpack.c.b16 %v178, %v177
      %195 = vmatprep.subr.bf16.mxu0 0
      %196 = vmatpush1.bf16.msra.mxu0 %v186
      %197 = vmatprep.subr.bf16.mxu0 0
      %198 = vmatpush1.bf16.msra.mxu0 %v185
      %199 = vmatprep.subr.bf16.mxu0 0
      %200 = vmatpush1.bf16.msra.mxu0 %v184
      %201 = vmatprep.subr.bf16.mxu0 0
      %202 = vmatpush1.bf16.msra.mxu0 %v183
      %203 = vmatprep.subr.bf16.mxu0 0
      %204 = vmatpush1.bf16.msra.mxu0 %v182
      %205 = vmatprep.subr.bf16.mxu0 0
      %206 = vmatpush1.bf16.msra.mxu0 %v181
      %207 = vmatprep.subr.bf16.mxu0 0
      %208 = vmatpush1.bf16.msra.mxu0 %v180
      %209 = vmatprep.subr.bf16.mxu0 0
      %210 = vmatpush1.bf16.msra.mxu0 %v179
      %211 = vmatprep.subr.bf16.mxu0 0
      %212 = vmatpush2.bf16.msra.mxu0 0
      %213 = vmatprep.subr.bf16.mxu0 0
      %214 = vmatpush2.bf16.msra.mxu0 0
      %215 = vmatprep.subr.bf16.mxu0 0
      %216 = vmatpush2.bf16.msra.mxu0 0
      %217 = vmatprep.subr.bf16.mxu0 0
      %218 = vmatpush2.bf16.msra.mxu0 0
      %219 = vmatprep.subr.bf16.mxu0 0
      %220 = vmatpush2.bf16.msra.mxu0 0
      %221 = vmatprep.subr.bf16.mxu0 0
      %222 = vmatpush2.bf16.msra.mxu0 0
      %223 = vmatprep.subr.bf16.mxu0 0
      %224 = vmatpush2.bf16.msra.mxu0 0
      %225 = vmatprep.subr.bf16.mxu0 0
      %226 = vmatpush2.bf16.msra.mxu0 0
      %227 = vmatprep.mubr.bf16.mxu0 0
      %228 = vmatmul.mubr.bf16.gmra.mxu0 %v130
      %v229 = vpop.f32.mrf.mxu0
      %v230 = vadd.f32 0.0, %v229
      %v231 = vpop.f32.mrf.mxu0
      %v232 = vpop.f32.mrf.mxu0
      %v233 = vpop.f32.mrf.mxu0
      %234 = vdwg.mxu0
      %vm235 = vcmask 195584
      %236 = vst.msk [vmem:[#allocation2] sm:$0xff] %vm235, %v230
      %v237 = vld [vmem:[%s5] sm:$0x1]
      %v239 = vlaneseq
      %v240 = vshrl.u32 %v239, 7
      %v241 = vsub.s32 0, %v240
      %v242 = vrot.slane %v237, %v241
      %v244 = vmul.f32 %v125, %v242
      %245 = vadd.xlane.f32.xlu0 %v244
      %v246 = vpop.xlane.xlu0 %245
      %vm247 = vcmask 7168
      %248 = vst.msk [vmem:[#allocation3] sm:$0xff] %vm247, %v246
      %249 = vst.msk [vmem:[#allocation4] sm:$0xff] %vm247, -inf
      %250 = vst.msk [vmem:[#allocation5] sm:$0xff] %vm247, 0.0
      %251 = vst.msk [vmem:[#allocation6] sm:$0xff] %vm235, 0.0
    $region45: #{tpu_custom_call.1} parent=1 // pred_fallthru
      _
    %v252 = vld [vmem:[%s1] sm:$0xff]
    %v253 = vld [vmem:[%s1 + $0x8] sm:$0xff]
    %v254 = vld [vmem:[%s1 + $0x10] sm:$0xff]
    %v255 = vld [vmem:[%s1 + $0x18] sm:$0xff]
    %v256 = vld [vmem:[%s1 + $0x20] sm:$0xff]
    %v257 = vld [vmem:[%s1 + $0x28] sm:$0xff]
    %v258 = vld [vmem:[%s1 + $0x30] sm:$0xff]
    %v259 = vld [vmem:[%s1 + $0x38] sm:$0xff]
    %v260 = vld [vmem:[#allocation2] sm:$0xff]
    %v262 = vcombine.high %v260, %v260
    %v264 = vunpack.c.l.s4 1966171168
    %v265 = vunpack.c.0.s8 %v264
    %v266 = vlaneseq
    %v267 = vshrl.u32 %v266, 7
    %v268 = vsub.s32 %v265, %v267
    %v269 = vrot.slane %v260, %v268
    %v271 = vunpack.c.l.s4 1966171168
    %v272 = vunpack.c.0.s8 %v271
    %v273 = vlaneseq
    %v274 = vshrl.u32 %v273, 7
    %v275 = vsub.s32 %v272, %v274
    %v276 = vrot.slane %v262, %v275
    %v277 = vcombine.high %v269, %v269
    %v278 = vcombine.high %v276, %v276
    %v280 = vunpack.c.l.s4 1966171168
    %v281 = vunpack.c.0.s8 %v280
    %v282 = vlaneseq
    %v283 = vshrl.u32 %v282, 7
    %v284 = vsub.s32 %v281, %v283
    %v285 = vrot.slane %v269, %v284
    %v287 = vunpack.c.l.s4 1966171168
    %v288 = vunpack.c.0.s8 %v287
    %v289 = vlaneseq
    %v290 = vshrl.u32 %v289, 7
    %v291 = vsub.s32 %v288, %v290
    %v292 = vrot.slane %v276, %v291
    %v294 = vunpack.c.l.s4 1966171168
    %v295 = vunpack.c.0.s8 %v294
    %v296 = vlaneseq
    %v297 = vshrl.u32 %v296, 7
    %v298 = vsub.s32 %v295, %v297
    %v299 = vrot.slane %v277, %v298
    %v301 = vunpack.c.l.s4 1966171168
    %v302 = vunpack.c.0.s8 %v301
    %v303 = vlaneseq
    %v304 = vshrl.u32 %v303, 7
    %v305 = vsub.s32 %v302, %v304
    %v306 = vrot.slane %v278, %v305
    %v307 = vcombine.high %v285, %v285
    %v308 = vcombine.high %v292, %v292
    %v309 = vcombine.high %v299, %v299
    %v310 = vcombine.high %v306, %v306
    %v311 = vlaneseq
    %v312 = vshrl.u32 %v311, 7
    %v313 = vsub.s32 0, %v312
    %v314 = vrot.slane %v285, %v313
    %v315 = vlaneseq
    %v316 = vshrl.u32 %v315, 7
    %v317 = vsub.s32 0, %v316
    %v318 = vrot.slane %v299, %v317
    %v319 = vlaneseq
    %v320 = vshrl.u32 %v319, 7
    %v321 = vsub.s32 0, %v320
    %v322 = vrot.slane %v307, %v321
    %v323 = vlaneseq
    %v324 = vshrl.u32 %v323, 7
    %v325 = vsub.s32 0, %v324
    %v326 = vrot.slane %v309, %v325
    %v327 = vlaneseq
    %v328 = vshrl.u32 %v327, 7
    %v329 = vsub.s32 0, %v328
    %v330 = vrot.slane %v292, %v329
    %v331 = vlaneseq
    %v332 = vshrl.u32 %v331, 7
    %v333 = vsub.s32 0, %v332
    %v334 = vrot.slane %v306, %v333
    %v335 = vlaneseq
    %v336 = vshrl.u32 %v335, 7
    %v337 = vsub.s32 0, %v336
    %v338 = vrot.slane %v308, %v337
    %v339 = vlaneseq
    %v340 = vshrl.u32 %v339, 7
    %v341 = vsub.s32 0, %v340
    %v342 = vrot.slane %v310, %v341
    %v351 = vmul.f32 %v252, %v314
    %v352 = vmul.f32 %v253, %v318
    %v353 = vmul.f32 %v254, %v322
    %v354 = vmul.f32 %v255, %v326
    %v355 = vmul.f32 %v256, %v330
    %v356 = vmul.f32 %v257, %v334
    %v357 = vmul.f32 %v258, %v338
    %v358 = vmul.f32 %v259, %v342
    %vm359 = vcmask 195584
    %v360 = vsel %vm359, %v351, 0.0
    %361 = vadd.xlane.f32.xlu0 %v360
    %v362 = vpop.xlane.xlu0 %361
    %v363 = vsel %vm359, %v352, 0.0
    %364 = vadd.xlane.f32.xlu0 %v363
    %v365 = vpop.xlane.xlu0 %364
    %v366 = vsel %vm359, %v353, 0.0
    %367 = vadd.xlane.f32.xlu0 %v366
    %v368 = vpop.xlane.xlu0 %367
    %v369 = vsel %vm359, %v354, 0.0
    %370 = vadd.xlane.f32.xlu0 %v369
    %v371 = vpop.xlane.xlu0 %370
    %v372 = vsel %vm359, %v355, 0.0
    %373 = vadd.xlane.f32.xlu0 %v372
    %v374 = vpop.xlane.xlu0 %373
    %v375 = vsel %vm359, %v356, 0.0
    %376 = vadd.xlane.f32.xlu0 %v375
    %v377 = vpop.xlane.xlu0 %376
    %v378 = vsel %vm359, %v357, 0.0
    %379 = vadd.xlane.f32.xlu0 %v378
    %v380 = vpop.xlane.xlu0 %379
    %v381 = vsel %vm359, %v358, 0.0
    %382 = vadd.xlane.f32.xlu0 %v381
    %v383 = vpop.xlane.xlu0 %382
    %v384 = vld [vmem:[#allocation3] sm:$0xff]
    %386 = vset.pattern.permute.xlu0 0
    %387 = vperm.xlu0 %386, %v384
    %v388 = vpop.permute.xlu0 %387
    %v389 = vlaneseq
    %v390 = vshrl.u32 %v389, 7
    %v391 = vsub.s32 0, %v390
    %v392 = vrot.slane %v388, %v391
    %v393 = vlaneseq
    %v394 = vshrl.u32 %v393, 7
    %v395 = vsub.s32 1, %v394
    %v396 = vrot.slane %v388, %v395
    %v397 = vlaneseq
    %v398 = vshrl.u32 %v397, 7
    %v399 = vsub.s32 2, %v398
    %v400 = vrot.slane %v388, %v399
    %v401 = vlaneseq
    %v402 = vshrl.u32 %v401, 7
    %v403 = vsub.s32 3, %v402
    %v404 = vrot.slane %v388, %v403
    %v405 = vlaneseq
    %v406 = vshrl.u32 %v405, 7
    %v407 = vsub.s32 4, %v406
    %v408 = vrot.slane %v388, %v407
    %v409 = vlaneseq
    %v410 = vshrl.u32 %v409, 7
    %v411 = vsub.s32 5, %v410
    %v412 = vrot.slane %v388, %v411
    %v413 = vlaneseq
    %v414 = vshrl.u32 %v413, 7
    %v415 = vsub.s32 6, %v414
    %v416 = vrot.slane %v388, %v415
    %v417 = vlaneseq
    %v418 = vshrl.u32 %v417, 7
    %v419 = vsub.s32 7, %v418
    %v420 = vrot.slane %v388, %v419
    %v429 = vadd.f32 %v362, %v392
    %v430 = vadd.f32 %v365, %v396
    %v431 = vadd.f32 %v368, %v400
    %v432 = vadd.f32 %v371, %v404
    %v433 = vadd.f32 %v374, %v408
    %v434 = vadd.f32 %v377, %v412
    %v435 = vadd.f32 %v380, %v416
    %v436 = vadd.f32 %v383, %v420
    %v437 = vmul.f32 %v429, 0.17677669
    %v438 = vmul.f32 %v430, 0.17677669
    %v439 = vmul.f32 %v431, 0.17677669
    %v440 = vmul.f32 %v432, 0.17677669
    %v441 = vmul.f32 %v433, 0.17677669
    %v442 = vmul.f32 %v434, 0.17677669
    %v443 = vmul.f32 %v435, 0.17677669
    %v444 = vmul.f32 %v436, 0.17677669
    %s445 = smul.u32 0, 8
    %v446 = vlaneseq
    %v447 = vand.u32 %v446, 127
    %v448 = vstv %s445
    %v449 = vadd.s32 %v448, %v447
    %vm450 = vcmp.lt.s32.totalorder %v449, 8
    %459 = vset.pattern.permute.xlu0 0
    %460 = vperm.xlu0 %459, %v437
    %v461 = vpop.permute.xlu0 %460
    %462 = vset.pattern.permute.xlu0 0
    %463 = vperm.xlu0 %462, %v438
    %v464 = vpop.permute.xlu0 %463
    %465 = vset.pattern.permute.xlu0 0
    %466 = vperm.xlu0 %465, %v439
    %v467 = vpop.permute.xlu0 %466
    %468 = vset.pattern.permute.xlu0 0
    %469 = vperm.xlu0 %468, %v440
    %v470 = vpop.permute.xlu0 %469
    %471 = vset.pattern.permute.xlu0 0
    %472 = vperm.xlu0 %471, %v441
    %v473 = vpop.permute.xlu0 %472
    %474 = vset.pattern.permute.xlu0 0
    %475 = vperm.xlu0 %474, %v442
    %v476 = vpop.permute.xlu0 %475
    %477 = vset.pattern.permute.xlu0 0
    %478 = vperm.xlu0 %477, %v443
    %v479 = vpop.permute.xlu0 %478
    %480 = vset.pattern.permute.xlu0 0
    %481 = vperm.xlu0 %480, %v444
    %v482 = vpop.permute.xlu0 %481
    %v483 = vlaneseq
    %v484 = vshrl.u32 %v483, 7
    %v485 = vsub.s32 %v447, %v484
    %v486 = vrot.slane %v461, %v485
    %v487 = vlaneseq
    %v488 = vshrl.u32 %v487, 7
    %v489 = vsub.s32 %v447, %v488
    %v490 = vrot.slane %v464, %v489
    %v491 = vlaneseq
    %v492 = vshrl.u32 %v491, 7
    %v493 = vsub.s32 %v447, %v492
    %v494 = vrot.slane %v467, %v493
    %v495 = vlaneseq
    %v496 = vshrl.u32 %v495, 7
    %v497 = vsub.s32 %v447, %v496
    %v498 = vrot.slane %v470, %v497
    %v499 = vlaneseq
    %v500 = vshrl.u32 %v499, 7
    %v501 = vsub.s32 %v447, %v500
    %v502 = vrot.slane %v473, %v501
    %v503 = vlaneseq
    %v504 = vshrl.u32 %v503, 7
    %v505 = vsub.s32 %v447, %v504
    %v506 = vrot.slane %v476, %v505
    %v507 = vlaneseq
    %v508 = vshrl.u32 %v507, 7
    %v509 = vsub.s32 %v447, %v508
    %v510 = vrot.slane %v479, %v509
    %v511 = vlaneseq
    %v512 = vshrl.u32 %v511, 7
    %v513 = vsub.s32 %v447, %v512
    %v514 = vrot.slane %v482, %v513
    %vm515 = vcmask 1041409
    %v516 = vsel %vm515, %v490, %v486
    %vm517 = vcmask 1042434
    %v518 = vsel %vm517, %v494, %v516
    %vm519 = vcmask 1043459
    %v520 = vsel %vm519, %v498, %v518
    %vm521 = vcmask 1044484
    %v522 = vsel %vm521, %v502, %v520
    %vm523 = vcmask 1045509
    %v524 = vsel %vm523, %v506, %v522
    %vm525 = vcmask 1046534
    %v526 = vsel %vm525, %v510, %v524
    %vm527 = vcmask 1047559
    %v528 = vsel %vm527, %v514, %v526
    %v530 = vsel %vm450, %v528, -inf
    %v531 = vld [vmem:[#allocation4] sm:$0xff]
    %vm532 = vcmask 64512
    %v533 = vsel %vm532, %v530, -inf
    %534 = vmax.xlane.f32.xlu0 %v533
    %v535 = vpop.xlane.xlu0 %534
    %v536 = vmax.f32 %v531, %v535
    %v537 = vsub.f32 %v531, %v536
    %v538 = vmul.f32 %v537, 1.442695
    %v539 = vpow.pop %v538
    %541 = vset.pattern.permute.xlu0 0
    %542 = vperm.xlu0 %541, %v536
    %v543 = vpop.permute.xlu0 %542
    %v545 = vsub.f32 %v530, %v543
    %v546 = vmul.f32 %v545, 1.442695
    %v547 = vpow.pop %v546
    %v548 = vld [vmem:[#allocation5] sm:$0xff]
    %v549 = vmul.f32 %v539, %v548
    %v550 = vsel %vm532, %v547, 0.0
    %551 = vadd.xlane.f32.xlu0 %v550
    %v552 = vpop.xlane.xlu0 %551
    %v553 = vadd.f32 %v549, %v552
    %vm554 = vcmask 7168
    %555 = vst.msk [vmem:[#allocation5] sm:$0xff] %vm554, %v553
    %v556 = vld [vmem:[#allocation6] sm:$0xff]
    %558 = vset.pattern.permute.xlu0 0
    %559 = vperm.xlu0 %558, %v539
    %v560 = vpop.permute.xlu0 %559
    %v562 = vmul.f32 %v560, %v556
    %v563 = vlaneseq
    %v564 = vshrl.u32 %v563, 7
    %v565 = vsub.s32 0, %v564
    %v566 = vrot.slane %v547, %v565
    %568 = vbcast.lane.b32.xlu0 %v566, 256
    %v569 = vpop.permute.xlu0 %568
    %v570 = vlaneseq
    %v571 = vshrl.u32 %v570, 7
    %v572 = vsub.s32 1, %v571
    %v573 = vrot.slane %v547, %v572
    %575 = vbcast.lane.b32.xlu0 %v573, 256
    %v576 = vpop.permute.xlu0 %575
    %v577 = vlaneseq
    %v578 = vshrl.u32 %v577, 7
    %v579 = vsub.s32 2, %v578
    %v580 = vrot.slane %v547, %v579
    %582 = vbcast.lane.b32.xlu0 %v580, 256
    %v583 = vpop.permute.xlu0 %582
    %v584 = vlaneseq
    %v585 = vshrl.u32 %v584, 7
    %v586 = vsub.s32 3, %v585
    %v587 = vrot.slane %v547, %v586
    %589 = vbcast.lane.b32.xlu0 %v587, 256
    %v590 = vpop.permute.xlu0 %589
    %v591 = vlaneseq
    %v592 = vshrl.u32 %v591, 7
    %v593 = vsub.s32 4, %v592
    %v594 = vrot.slane %v547, %v593
    %596 = vbcast.lane.b32.xlu0 %v594, 256
    %v597 = vpop.permute.xlu0 %596
    %v598 = vlaneseq
    %v599 = vshrl.u32 %v598, 7
    %v600 = vsub.s32 5, %v599
    %v601 = vrot.slane %v547, %v600
    %603 = vbcast.lane.b32.xlu0 %v601, 256
    %v604 = vpop.permute.xlu0 %603
    %v605 = vlaneseq
    %v606 = vshrl.u32 %v605, 7
    %v607 = vsub.s32 6, %v606
    %v608 = vrot.slane %v547, %v607
    %610 = vbcast.lane.b32.xlu0 %v608, 256
    %v611 = vpop.permute.xlu0 %610
    %v612 = vlaneseq
    %v613 = vshrl.u32 %v612, 7
    %v614 = vsub.s32 7, %v613
    %v615 = vrot.slane %v547, %v614
    %617 = vbcast.lane.b32.xlu0 %v615, 256
    %v618 = vpop.permute.xlu0 %617
    %v619 = vmul.f32 %v569, %v252
    %v620 = vmul.f32 %v576, %v253
    %v621 = vmul.f32 %v583, %v254
    %v622 = vmul.f32 %v590, %v255
    %v623 = vmul.f32 %v597, %v256
    %v624 = vmul.f32 %v604, %v257
    %v625 = vmul.f32 %v611, %v258
    %v626 = vmul.f32 %v618, %v259
    %v627 = vsel %vm359, %v619, 0.0
    %v628 = vrot.slane %v627, 4
    %v629 = vadd.f32 %v627, %v628
    %v630 = vrot.slane %v629, 2
    %v631 = vadd.f32 %v629, %v630
    %v632 = vrot.slane %v631, 1
    %v633 = vadd.f32 %v631, %v632
    %v634 = vsel %vm359, %v620, 0.0
    %v635 = vrot.slane %v634, 4
    %v636 = vadd.f32 %v634, %v635
    %v637 = vrot.slane %v636, 2
    %v638 = vadd.f32 %v636, %v637
    %v639 = vrot.slane %v638, 1
    %v640 = vadd.f32 %v638, %v639
    %v641 = vsel %vm359, %v621, 0.0
    %v642 = vrot.slane %v641, 4
    %v643 = vadd.f32 %v641, %v642
    %v644 = vrot.slane %v643, 2
    %v645 = vadd.f32 %v643, %v644
    %v646 = vrot.slane %v645, 1
    %v647 = vadd.f32 %v645, %v646
    %v648 = vsel %vm359, %v622, 0.0
    %v649 = vrot.slane %v648, 4
    %v650 = vadd.f32 %v648, %v649
    %v651 = vrot.slane %v650, 2
    %v652 = vadd.f32 %v650, %v651
    %v653 = vrot.slane %v652, 1
    %v654 = vadd.f32 %v652, %v653
    %v655 = vsel %vm359, %v623, 0.0
    %v656 = vrot.slane %v655, 4
    %v657 = vadd.f32 %v655, %v656
    %v658 = vrot.slane %v657, 2
    %v659 = vadd.f32 %v657, %v658
    %v660 = vrot.slane %v659, 1
    %v661 = vadd.f32 %v659, %v660
    %v662 = vsel %vm359, %v624, 0.0
    %v663 = vrot.slane %v662, 4
    %v664 = vadd.f32 %v662, %v663
    %v665 = vrot.slane %v664, 2
    %v666 = vadd.f32 %v664, %v665
    %v667 = vrot.slane %v666, 1
    %v668 = vadd.f32 %v666, %v667
    %v669 = vsel %vm359, %v625, 0.0
    %v670 = vrot.slane %v669, 4
    %v671 = vadd.f32 %v669, %v670
    %v672 = vrot.slane %v671, 2
    %v673 = vadd.f32 %v671, %v672
    %v674 = vrot.slane %v673, 1
    %v675 = vadd.f32 %v673, %v674
    %v676 = vsel %vm359, %v626, 0.0
    %v677 = vrot.slane %v676, 4
    %v678 = vadd.f32 %v676, %v677
    %v679 = vrot.slane %v678, 2
    %v680 = vadd.f32 %v678, %v679
    %v681 = vrot.slane %v680, 1
    %v682 = vadd.f32 %v680, %v681
    %v691 = vsel %vm515, %v640, %v633
    %v692 = vsel %vm517, %v647, %v691
    %v693 = vsel %vm519, %v654, %v692
    %v694 = vsel %vm521, %v661, %v693
    %v695 = vsel %vm523, %v668, %v694
    %v696 = vsel %vm525, %v675, %v695
    %v697 = vsel %vm527, %v682, %v696
    %v699 = vadd.f32 %v562, %v697
    %700 = vst.msk [vmem:[#allocation6] sm:$0xff] %vm359, %v699
    %701 = vst.msk [vmem:[#allocation4] sm:$0xff] %vm554, %v536
    // Predicated region
    $region46: #{tpu_custom_call.1} parent=1 // pred_check
      %p702 = pneg %p57
    $region47: #{tpu_custom_call.1} parent=1 // pred_check_branch
      %704 = sbr.rel (%p702) target = $region49
    $region48: #{tpu_custom_call.1} parent=1 // pred_region
      %v705 = vld [vmem:[#allocation6] sm:$0xff]
      %v706 = vld [vmem:[#allocation5] sm:$0xff]
      %v707 = vrcp.pop %v706
      %709 = vset.pattern.permute.xlu0 0
      %710 = vperm.xlu0 %709, %v707
      %v711 = vpop.permute.xlu0 %710
      %v713 = vmul.f32 %v705, %v711
      %v714 = vpack.c.bf16 %v713, %v713
      %v715 = vld [vmem:[%s6] sm:$0xf]
      %v716 = vld [vmem:[%s6 + $0x4] sm:$0xf]
      %v717 = vld [vmem:[%s6 + $0x8] sm:$0xf]
      %v718 = vld [vmem:[%s7] sm:$0x1]
      %v720 = vlaneseq
      %v721 = vshrl.u32 %v720, 7
      %v722 = vsub.s32 0, %v721
      %v723 = vrot.slane %v718, %v722
      %v728 = vunpack.c.l.b16 %v715
      %v729 = vunpack.c.l.b16 %v716
      %v730 = vunpack.c.l.b16 %v717
      %v731 = vpack.c.b16 %v729, %v728
      %v732 = vpack.c.b16 %v730, %v730
      %v735 = vsel %vm359, %v714, 0
      %vm737 = vcmask 1043456
      %v739 = vsel %vm737, %v732, 0
      %741 = vmatprep.subr.bf16.mxu0 0
      %742 = vmatpush1.bf16.msra.mxu0 0
      %743 = vmatprep.subr.bf16.mxu0 0
      %744 = vmatpush1.bf16.msra.mxu0 0
      %745 = vmatprep.subr.bf16.mxu0 0
      %746 = vmatpush1.bf16.msra.mxu0 0
      %747 = vmatprep.subr.bf16.mxu0 0
      %748 = vmatpush1.bf16.msra.mxu0 0
      %749 = vmatprep.subr.bf16.mxu0 0
      %750 = vmatpush1.bf16.msra.mxu0 0
      %751 = vmatprep.subr.bf16.mxu0 0
      %752 = vmatpush1.bf16.msra.mxu0 0
      %753 = vmatprep.subr.bf16.mxu0 0
      %754 = vmatpush1.bf16.msra.mxu0 %v739
      %755 = vmatprep.subr.bf16.mxu0 0
      %756 = vmatpush1.bf16.msra.mxu0 %v731
      %757 = vmatprep.subr.bf16.mxu0 0
      %758 = vmatpush2.bf16.msra.mxu0 0
      %759 = vmatprep.subr.bf16.mxu0 0
      %760 = vmatpush2.bf16.msra.mxu0 0
      %761 = vmatprep.subr.bf16.mxu0 0
      %762 = vmatpush2.bf16.msra.mxu0 0
      %763 = vmatprep.subr.bf16.mxu0 0
      %764 = vmatpush2.bf16.msra.mxu0 0
      %765 = vmatprep.subr.bf16.mxu0 0
      %766 = vmatpush2.bf16.msra.mxu0 0
      %767 = vmatprep.subr.bf16.mxu0 0
      %768 = vmatpush2.bf16.msra.mxu0 0
      %769 = vmatprep.subr.bf16.mxu0 0
      %770 = vmatpush2.bf16.msra.mxu0 0
      %771 = vmatprep.subr.bf16.mxu0 0
      %772 = vmatpush2.bf16.msra.mxu0 0
      %773 = vmatprep.mubr.bf16.mxu0 0
      %774 = vmatmul.mubr.bf16.gmra.mxu0 %v735
      %v775 = vpop.f32.mrf.mxu0
      %v776 = vadd.f32 %v723, %v775
      %v777 = vpop.f32.mrf.mxu0
      %v778 = vpop.f32.mrf.mxu0
      %v779 = vpop.f32.mrf.mxu0
      %780 = vdwg.mxu0
      %781 = vst [vmem:[#allocation12] sm:$0xff] %v776
    $region49: #{tpu_custom_call.1} parent=1 // pred_fallthru
      _
    // Predicated region
    $region50: #{tpu_custom_call.1} parent=1 // pred_check
      _
    $region51: #{tpu_custom_call.1} parent=1 // pred_check_branch
      %783 = sbr.rel (0) target = $region53
    $region52: #{tpu_custom_call.1} parent=1 // pred_region
      %s785 = ssub.s32 128, 128
      %786 = vsyncadd [#allocation9], %s785
      %s788 = sshll.u32 [#allocation12], 4
      %s789 = int_to_ptr.vmem [resolvable:$true] %s788
      %791 = dma.vmem_to_hbm [thread:$0]  %s789, 128, %s8, [#allocation9]
    $region53: #{tpu_custom_call.1} parent=1 // pred_fallthru
      _
    // Predicated region
    $region54: #{tpu_custom_call.1} parent=1 // pred_check
      _
    $region55: #{tpu_custom_call.1} parent=1 // pred_check_branch
      %793 = sbr.rel (0) target = $region57
    $region56: #{tpu_custom_call.1} parent=1 // pred_region
      %794 = dma.done [#allocation9], 128
    $region57: #{tpu_custom_call.1} parent=1 // pred_fallthru
      _
    %795 = vsyncpa [#allocation8], 1
    %796 = vsyncpa [#allocation11], 1
    %797 = vsyncpa [#allocation9], 1

</llo_original>
